<compile_context>
chip_gen: v7x
topology: tpu7x:2x2x1
jax: 0.10.0
libtpu: 0.0.40
codegen_flags: <defaults>
</compile_context>

<pallas_src>
import math

import jax
import jax.numpy as jnp
from jax.experimental import pallas as pl
from jax.experimental.pallas import tpu as pltpu


def _layerscale_kernel(x_ref, g_ref, o_ref):
    # x_ref: (TM, W) tile, g_ref: (1, W) resident gamma row, o_ref: (TM, W).
    o_ref[...] = (x_ref[...] * g_ref[...]).astype(o_ref.dtype)


def layer_scale(x: jax.Array, gamma: jax.Array) -> jax.Array:
    """y = x * gamma.  x: (..., D), gamma: (D,), broadcast over leading dims."""
    orig_shape = x.shape
    D = orig_shape[-1]
    assert gamma.shape == (D,), "gamma must have shape (dim,)"
    total = math.prod(orig_shape)

    # Pick a lane-dense last dim W (multiple of 128) when possible.
    if D % 128 == 0:
        W = D
        g_row = gamma
    else:
        W = (D * 128) // math.gcd(D, 128)  # lcm(D, 128): multiple of D and 128
        if total % W == 0:
            g_row = jnp.tile(gamma, W // D)  # exact: gamma is periodic in D
        else:
            # Fallback: natural feature-dim layout (correct, just lane-sparse).
            W = D
            g_row = gamma

    rows = total // W
    x2d = x.reshape(rows, W)
    g2d = g_row.reshape(1, W)

    # Row-tile: ~2 MiB blocks, multiple of 8 sublanes (or the full row count).
    itemsize = jnp.dtype(x.dtype).itemsize
    target_rows = max(8, (2 * 1024 * 1024) // max(1, W * itemsize))
    if rows >= 8:
        tm = min(rows, (target_rows // 8) * 8)
    else:
        tm = rows
    tm = max(tm, 1)

    grid = (pl.cdiv(rows, tm),)

    y2d = pl.pallas_call(
        _layerscale_kernel,
        out_shape=jax.ShapeDtypeStruct((rows, W), x.dtype),
        grid_spec=pltpu.PrefetchScalarGridSpec(
            num_scalar_prefetch=0,
            grid=grid,
            in_specs=[
                pl.BlockSpec((tm, W), lambda i: (i, 0)),
                pl.BlockSpec((1, W), lambda i: (0, 0)),  # gamma resident in VMEM
            ],
            out_specs=pl.BlockSpec((tm, W), lambda i: (i, 0)),
        ),
        compiler_params=pltpu.CompilerParams(
            dimension_semantics=("parallel",),
            vmem_limit_bytes=32 << 20,
        ),
    )(x2d, g2d)

    return y2d.reshape(orig_shape)


if __name__ == "__main__":
    key = jax.random.PRNGKey(0)

    B, N, D = 2, 8, 32          # batch, tokens, feature dim
    init_values = 1e-5

    # Deterministic parameter init, matching nn.Parameter(init_values * ones(dim))
    gamma = init_values * jnp.ones((D,), dtype=jnp.float32)

    x = jax.random.normal(key, (B, N, D), dtype=jnp.float32)

    y = layer_scale(x, gamma)
    jax.block_until_ready(y)

    # Correctness check against plain-JAX reference
    y_ref = x * gamma
    assert y.shape == x.shape and y.dtype == x.dtype
    assert jnp.allclose(y, y_ref, rtol=1e-6, atol=1e-6), "mismatch vs reference"

    # TODO(synk): the PyTorch `inplace` flag has no functional-JAX equivalent;
    # aliasing x into the output (input_output_aliases) would only save an HBM
    # allocation and is omitted here.
    print("KERNEL_OK")
</pallas_src>

<mosaic_0001>
module attributes {stable_mosaic.version = 11 : i64} {
  func.func @_layerscale_kernel(%arg0: i32, %arg1: memref<4x128xf32, #tpu.memory_space<vmem>>, %arg2: memref<1x128xf32, #tpu.memory_space<vmem>>, %arg3: memref<4x128xf32, #tpu.memory_space<vmem>>) attributes {dimension_semantics = [#tpu.dimension_semantics<parallel>], iteration_bounds = array<i64: 1>, scalar_prefetch = 0 : i64, scratch_operands = 0 : i64, tpu.core_type = #tpu.core_type<tc>, window_params = [{transform_indices = @transform_0, window_bounds = array<i64: 4, 128>}, {pipeline_mode = #tpu.pipeline_mode<synchronous>, transform_indices = @transform_1, window_bounds = array<i64: 1, 128>}, {transform_indices = @transform_2, window_bounds = array<i64: 4, 128>}]} {
    %c0 = arith.constant 0 : index
    %c0_0 = arith.constant 0 : index
    %0 = vector.load %arg1[%c0, %c0_0] : memref<4x128xf32, #tpu.memory_space<vmem>>, vector<4x128xf32>
    %c0_1 = arith.constant 0 : index
    %c0_2 = arith.constant 0 : index
    %1 = vector.load %arg2[%c0_1, %c0_2] : memref<1x128xf32, #tpu.memory_space<vmem>>, vector<1x128xf32>
    %2 = vector.broadcast %1 : vector<1x128xf32> to vector<4x128xf32>
    %3 = arith.mulf %0, %2 : vector<4x128xf32>
    %c0_3 = arith.constant 0 : index
    %c0_4 = arith.constant 0 : index
    %4 = vector.load %arg3[%c0_3, %c0_4] : memref<4x128xf32, #tpu.memory_space<vmem>>, vector<4x128xf32>
    tpu.vector_store %arg3[%c0_3, %c0_4], %3 {strides = array<i32>} : memref<4x128xf32, #tpu.memory_space<vmem>>, vector<4x128xf32>,
    return
  }
  func.func @transform_0(%arg0: i32) -> (i32, i32) {
    %c0_i32 = arith.constant 0 : i32
    %c0_i32_0 = arith.constant 0 : i32
    return %arg0, %c0_i32 : i32, i32
  }
  func.func @transform_1(%arg0: i32) -> (i32, i32) {
    %c0_i32 = arith.constant 0 : i32
    %c0_i32_0 = arith.constant 0 : i32
    %c0_i32_1 = arith.constant 0 : i32
    return %c0_i32, %c0_i32_0 : i32, i32
  }
  func.func @transform_2(%arg0: i32) -> (i32, i32) {
    %c0_i32 = arith.constant 0 : i32
    %c0_i32_0 = arith.constant 0 : i32
    return %arg0, %c0_i32 : i32, i32
  }
}

</mosaic_0001>

<llo_original>
// kernel: tpu_custom_call.1
$region0: #{tpu_custom_call.1}
  #allocation0 [shape = 'u32[]', space=smem, size = 0x4, offset = 0x4, fixed_abs, tag = 'smem constant byte address 0x4 - core index']
  #allocation1 [shape = 'u32[144,128]{1,0:T(1,128)}', space=vmem, size = 0x12000, scoped, tag = 'internal scratch']
  %s0 = inlined_call_operand.hbm [shape: f32[4,128], index: 0, kind: input, shape index: {}]
  %s1 = inlined_call_operand.vmem [shape: f32[1,128], index: 1, kind: input, shape index: {}]
  %s2 = inlined_call_operand.hbm [shape: f32[4,128], index: 2, kind: output, shape index: {}]
  %s3 = sld [smem:[#allocation0]]
  $region22: #{tpu_custom_call.1} parent=0
    _
  %s5 = ssub.s32 1, %s3
  %s6 = scalar_select 0, %s5, %s3
  $region1: #{tpu_custom_call.1} parent=0
    #allocation2 [shape = 'u8[2048]{0}', space=vmem, size = 0x800, scoped, tag = 'input window, operand 0, single buffered']
    #allocation3 [shape = 's32[1]{0}', space=sflag, size = 0x4, scoped, tag = 'scoped memory for tpu_custom_call.1']
    #allocation4 [shape = 's32[1]{0}', space=sflag, size = 0x4, scoped, tag = 'scoped memory for tpu_custom_call.1']
    #allocation5 [shape = 'u8[2048]{0}', space=vmem, size = 0x800, scoped, tag = 'output window, operand 0, single buffered']
    %7 = vsyncpa [#allocation3], 0
    %8 = vsyncpa [#allocation4], 0
    // Predicated region
    $region2: #{tpu_custom_call.1} parent=1 // pred_check
      _
    $region3: #{tpu_custom_call.1} parent=1 // pred_check_branch
      %10 = sbr.rel (0) target = $region5
    $region4: #{tpu_custom_call.1} parent=1 // pred_region
      %s12 = ssub.s32 64, 64
      %13 = vsyncadd [#allocation3], %s12
      %s15 = sshll.u32 [#allocation2], 4
      %s16 = int_to_ptr.vmem [resolvable:$true] %s15
      %18 = dma.hbm_to_vmem [thread:$0]  %s0, 64, %s16, [#allocation3]
    $region5: #{tpu_custom_call.1} parent=1 // pred_fallthru
      _
    // Predicated region
    $region6: #{tpu_custom_call.1} parent=1 // pred_check
      _
    $region7: #{tpu_custom_call.1} parent=1 // pred_check_branch
      %20 = sbr.rel (0) target = $region9
    $region8: #{tpu_custom_call.1} parent=1 // pred_region
      _
    $region9: #{tpu_custom_call.1} parent=1 // pred_fallthru
      _
    // Predicated region
    $region10: #{tpu_custom_call.1} parent=1 // pred_check
      _
    $region11: #{tpu_custom_call.1} parent=1 // pred_check_branch
      %22 = sbr.rel (0) target = $region13
    $region12: #{tpu_custom_call.1} parent=1 // pred_region
      %23 = dma.done [#allocation3], 64
    $region13: #{tpu_custom_call.1} parent=1 // pred_fallthru
      _
    %v24 = vld [vmem:[#allocation2] sm:$0xf]
    %v25 = vld [vmem:[%s1] sm:$0x1]
    %v27 = vlaneseq
    %v28 = vshrl.u32 %v27, 7
    %v29 = vsub.s32 0, %v28
    %v30 = vrot.slane %v25, %v29
    %v32 = vmul.f32 %v24, %v30
    %33 = vst [vmem:[#allocation5] sm:$0xf] %v32
    // Predicated region
    $region14: #{tpu_custom_call.1} parent=1 // pred_check
      _
    $region15: #{tpu_custom_call.1} parent=1 // pred_check_branch
      %35 = sbr.rel (0) target = $region17
    $region16: #{tpu_custom_call.1} parent=1 // pred_region
      %s37 = ssub.s32 64, 64
      %38 = vsyncadd [#allocation4], %s37
      %s40 = sshll.u32 [#allocation5], 4
      %s41 = int_to_ptr.vmem [resolvable:$true] %s40
      %43 = dma.vmem_to_hbm [thread:$0]  %s41, 64, %s2, [#allocation4]
    $region17: #{tpu_custom_call.1} parent=1 // pred_fallthru
      _
    // Predicated region
    $region18: #{tpu_custom_call.1} parent=1 // pred_check
      _
    $region19: #{tpu_custom_call.1} parent=1 // pred_check_branch
      %45 = sbr.rel (0) target = $region21
    $region20: #{tpu_custom_call.1} parent=1 // pred_region
      %46 = dma.done [#allocation4], 64
    $region21: #{tpu_custom_call.1} parent=1 // pred_fallthru
      _
    %47 = vsyncpa [#allocation3], 1
    %48 = vsyncpa [#allocation4], 1

</llo_original>
